<compile_context>
chip_gen: v6e
topology: v6e:2x2x1
jax: 0.10.0
libtpu: 0.0.40
codegen_flags: <defaults>
</compile_context>

<pallas_src>
import functools

import jax
import jax.numpy as jnp
from jax.experimental import pallas as pl
from jax.experimental.pallas import tpu as pltpu


def _cbm_loss_kernel(c_pred_ref, c_ref, y_pred_ref, y_ref, part_ref, *,
                     use_sigmoid, batch, tile_b, tiles_per_core):
    p = pl.program_id(0)   # core ("parallel") index
    i = pl.program_id(1)   # batch-tile ("arbitrary") index within this core

    @pl.when(i == 0)
    def _init():
        part_ref[...] = jnp.zeros_like(part_ref)

    # Global (un-clamped) tile index for this step; rows >= batch are padding
    # (either the ragged tail of the last tile or a clamped duplicate tile on
    # the second core) and are masked out of both sums.
    g = p * tiles_per_core + i
    row0 = g * tile_b
    tb = c_pred_ref.shape[0]
    row_ids = row0 + jax.lax.broadcasted_iota(jnp.int32, (tb, 1), 0)  # (TB,1)
    valid = row_ids < batch                                           # (TB,1)

    # ---------------- concept loss: binary cross entropy ----------------
    cp = c_pred_ref[...].astype(jnp.float32)   # (TB, C)
    ct = c_ref[...].astype(jnp.float32)        # (TB, C)
    if use_sigmoid:
        # torch.nn.BCELoss: log terms clamped at -100
        log_p = jnp.maximum(jnp.log(cp), -100.0)
        log_1mp = jnp.maximum(jnp.log(1.0 - cp), -100.0)
        bce = -(ct * log_p + (1.0 - ct) * log_1mp)
    else:
        # torch.nn.BCEWithLogitsLoss (numerically stable)
        bce = jnp.maximum(cp, 0.0) - cp * ct + jnp.log1p(jnp.exp(-jnp.abs(cp)))
    bce = jnp.where(valid, bce, 0.0)           # mask padded rows (kills NaNs too)
    concept_sum = jnp.sum(bce)

    # --------------- task loss: softmax cross entropy --------------------
    logits = y_pred_ref[...].astype(jnp.float32)   # (TB, K)
    labels = y_ref[...]                            # (TB, 1) int32
    m = jnp.max(logits, axis=-1, keepdims=True)                               # (TB,1)
    lse = m + jnp.log(jnp.sum(jnp.exp(logits - m), axis=-1, keepdims=True))   # (TB,1)
    class_ids = jax.lax.broadcasted_iota(jnp.int32, logits.shape, 1)          # (TB,K)
    onehot = (class_ids == labels).astype(jnp.float32)                        # (TB,K)
    picked = jnp.sum(logits * onehot, axis=-1, keepdims=True)                 # (TB,1)
    ce = jnp.where(valid, lse - picked, 0.0)                                  # (TB,1)
    task_sum = jnp.sum(ce)

    # ------- accumulate scalar partial sums into this core's block -------
    rows = jax.lax.broadcasted_iota(jnp.int32, part_ref.shape, 0)
    lanes = jax.lax.broadcasted_iota(jnp.int32, part_ref.shape, 1)
    contrib = (jnp.where((rows == 0) & (lanes == 0), concept_sum, 0.0)
               + jnp.where((rows == 0) & (lanes == 1), task_sum, 0.0))
    part_ref[...] = part_ref[...] + contrib


def cbm_loss(pred, target, alpha, beta, use_sigmoid=True):
    """Pallas implementation of CBM_loss.forward.

    pred   = (c_pred [B, n_concepts], y_pred [B, n_classes])
    target = (c      [B, n_concepts], y      [B] int)
    Returns (loss, concept_loss, task_loss) as float32 scalars.
    """
    c_pred, y_pred = pred
    c, y = target
    B, C = c_pred.shape
    K = y_pred.shape[1]
    y2d = y.astype(jnp.int32).reshape(B, 1)

    # Batch tile: whole batch if small (block == full dim is always legal),
    # otherwise 512 sublane-aligned rows (comfortably double-buffered even on
    # v7x's smaller VMEM).
    TB = B if B <= 512 else 512
    nt = pl.cdiv(B, TB)          # number of real batch tiles
    NC = 2                       # v7x has 2 TensorCores; cheap no-op elsewhere
    T = pl.cdiv(nt, NC)          # tiles per core

    def row_map(p, i):
        # Clamp so over-covered tail tiles re-read a valid tile (masked in-kernel).
        g = jnp.minimum(p * T + i, nt - 1)
        return (g, 0)

    kernel = functools.partial(
        _cbm_loss_kernel, use_sigmoid=use_sigmoid, batch=B,
        tile_b=TB, tiles_per_core=T)

    in_bytes = (c_pred.size * c_pred.dtype.itemsize
                + c.size * c.dtype.itemsize
                + y_pred.size * y_pred.dtype.itemsize
                + y2d.size * 4)
    itemsize = max(c_pred.dtype.itemsize, y_pred.dtype.itemsize, 4)
    tile_bytes = TB * (2 * C + K + 1) * itemsize
    vmem_limit = int(min(max(4 * tile_bytes + (2 << 20), 16 << 20), 64 << 20))

    cost = pl.CostEstimate(
        flops=int(B * (8 * C + 8 * K)),
        transcendentals=int(B * (2 * C + K + 1)),
        bytes_accessed=int(in_bytes + NC * 8 * 128 * 4),
    )

    partials = pl.pallas_call(
        kernel,
        out_shape=jax.ShapeDtypeStruct((NC * 8, 128), jnp.float32),
        grid_spec=pltpu.PrefetchScalarGridSpec(
            num_scalar_prefetch=0,
            grid=(NC, T),
            in_specs=[
                pl.BlockSpec((TB, C), row_map),   # c_pred
                pl.BlockSpec((TB, C), row_map),   # c
                pl.BlockSpec((TB, K), row_map),   # y_pred logits
                pl.BlockSpec((TB, 1), row_map),   # y labels
            ],
            out_specs=pl.BlockSpec((8, 128), lambda p, i: (p, 0)),
        ),
        compiler_params=pltpu.CompilerParams(
            dimension_semantics=("parallel", "arbitrary"),
            vmem_limit_bytes=vmem_limit),
        cost_estimate=cost,
    )(c_pred, c, y_pred, y2d)

    # Finalize: combine per-core partial sums, divide by TRUE counts, combine.
    part = partials.reshape(NC, 8, 128)
    concept_loss = jnp.sum(part[:, 0, 0]) / jnp.float32(B * C)
    task_loss = jnp.sum(part[:, 0, 1]) / jnp.float32(B)
    loss = concept_loss * jnp.float32(alpha) + task_loss * jnp.float32(beta)
    return loss, concept_loss, task_loss


def _cbm_loss_ref(pred, target, alpha, beta, use_sigmoid=True):
    """Pure-JAX reference mirroring the PyTorch module."""
    c_pred, y_pred = pred
    c, y = target
    if use_sigmoid:
        bce = -(c * jnp.maximum(jnp.log(c_pred), -100.0)
                + (1.0 - c) * jnp.maximum(jnp.log(1.0 - c_pred), -100.0))
    else:
        x = c_pred
        bce = jnp.maximum(x, 0.0) - x * c + jnp.log1p(jnp.exp(-jnp.abs(x)))
    concept = jnp.mean(bce)
    ls = jax.nn.log_softmax(y_pred, axis=-1)
    task = -jnp.mean(jnp.take_along_axis(ls, y[:, None].astype(jnp.int32), axis=-1))
    return alpha * concept + beta * task, concept, task


if __name__ == "__main__":
    key = jax.random.PRNGKey(0)
    k1, k2, k3, k4 = jax.random.split(key, 4)

    B = 8            # batch
    n_concepts = 16  # number of binary concepts
    n_classes = 8    # number of task classes
    alpha, beta = 0.5, 1.0

    # use_sigmoid=True path: c_pred are probabilities (BCELoss)
    c_prob = jax.nn.sigmoid(jax.random.normal(k1, (B, n_concepts), jnp.float32))
    c = jax.random.bernoulli(k2, 0.5, (B, n_concepts)).astype(jnp.float32)
    y_logits = jax.random.normal(k3, (B, n_classes), jnp.float32)
    y = jax.random.randint(k4, (B,), 0, n_classes, jnp.int32)

    out_sig = cbm_loss((c_prob, y_logits), (c, y), alpha, beta, use_sigmoid=True)
    ref_sig = _cbm_loss_ref((c_prob, y_logits), (c, y), alpha, beta, use_sigmoid=True)

    # use_sigmoid=False path: c_pred are logits (BCEWithLogitsLoss)
    c_logit = jax.random.normal(k1, (B, n_concepts), jnp.float32)
    out_log = cbm_loss((c_logit, y_logits), (c, y), alpha, beta, use_sigmoid=False)
    ref_log = _cbm_loss_ref((c_logit, y_logits), (c, y), alpha, beta, use_sigmoid=False)

    jax.block_until_ready((out_sig, out_log))

    for got, want in zip(out_sig + out_log, ref_sig + ref_log):
        if not jnp.allclose(got, want, rtol=1e-5, atol=1e-5):
            raise AssertionError(f"mismatch: kernel={got} ref={want}")

    print("KERNEL_OK")
</pallas_src>

<mosaic_0001>
module attributes {stable_mosaic.version = 11 : i64} {
  func.func @_cbm_loss_kernel(%arg0: i32, %arg1: i32, %arg2: memref<8x16xf32, #tpu.memory_space<vmem>>, %arg3: memref<8x16xf32, #tpu.memory_space<vmem>>, %arg4: memref<8x8xf32, #tpu.memory_space<vmem>>, %arg5: memref<8x1xi32, #tpu.memory_space<vmem>>, %arg6: memref<8x128xf32, #tpu.memory_space<vmem>>) attributes {dimension_semantics = [#tpu.dimension_semantics<parallel>, #tpu.dimension_semantics<arbitrary>], iteration_bounds = array<i64: 2, 1>, scalar_prefetch = 0 : i64, scratch_operands = 0 : i64, tpu.core_type = #tpu.core_type<tc>, window_params = [{transform_indices = @transform_0, window_bounds = array<i64: 8, 16>}, {transform_indices = @transform_1, window_bounds = array<i64: 8, 16>}, {transform_indices = @transform_2, window_bounds = array<i64: 8, 8>}, {transform_indices = @transform_3, window_bounds = array<i64: 8, 1>}, {transform_indices = @transform_4, window_bounds = array<i64: 8, 128>}]} {
    %c0_i32 = arith.constant 0 : i32
    %0 = arith.cmpi eq, %arg1, %c0_i32 : i32
    %1 = arith.extui %0 : i1 to i32
    %c0_i32_0 = arith.constant 0 : i32
    %2 = arith.cmpi ne, %1, %c0_i32_0 : i32
    scf.if %2 {
      %cst_30 = arith.constant 0.000000e+00 : f32
      %84 = vector.broadcast %cst_30 : f32 to vector<8x128xf32>
      %c0_31 = arith.constant 0 : index
      %c0_32 = arith.constant 0 : index
      %85 = vector.load %arg6[%c0_31, %c0_32] : memref<8x128xf32, #tpu.memory_space<vmem>>, vector<8x128xf32>
      tpu.vector_store %arg6[%c0_31, %c0_32], %84 {strides = array<i32>} : memref<8x128xf32, #tpu.memory_space<vmem>>, vector<8x128xf32>,
    } else {
    }
    %c1_i32 = arith.constant 1 : i32
    %3 = arith.muli %arg0, %c1_i32 : i32
    %4 = arith.addi %3, %arg1 : i32
    %c8_i32 = arith.constant 8 : i32
    %5 = arith.muli %4, %c8_i32 : i32
    %6 = tpu.iota {dimensions = array<i32: 0>} : vector<8x1xi32>
    %7 = vector.broadcast %5 : i32 to vector<8x1xi32>
    %8 = arith.addi %7, %6 : vector<8x1xi32>
    %c8_i32_1 = arith.constant 8 : i32
    %9 = vector.broadcast %c8_i32_1 : i32 to vector<8x1xi32>
    %10 = arith.cmpi slt, %8, %9 : vector<8x1xi32>
    %c0 = arith.constant 0 : index
    %c0_2 = arith.constant 0 : index
    %11 = vector.load %arg2[%c0, %c0_2] : memref<8x16xf32, #tpu.memory_space<vmem>>, vector<8x16xf32>
    %c0_3 = arith.constant 0 : index
    %c0_4 = arith.constant 0 : index
    %12 = vector.load %arg3[%c0_3, %c0_4] : memref<8x16xf32, #tpu.memory_space<vmem>>, vector<8x16xf32>
    %13 = math.log %11 : vector<8x16xf32>
    %cst = arith.constant -1.000000e+02 : f32
    %14 = vector.broadcast %cst : f32 to vector<8x16xf32>
    %15 = arith.maximumf %13, %14 : vector<8x16xf32>
    %cst_5 = arith.constant 1.000000e+00 : f32
    %16 = vector.broadcast %cst_5 : f32 to vector<8x16xf32>
    %17 = arith.subf %16, %11 : vector<8x16xf32>
    %18 = math.log %17 : vector<8x16xf32>
    %cst_6 = arith.constant -1.000000e+02 : f32
    %19 = vector.broadcast %cst_6 : f32 to vector<8x16xf32>
    %20 = arith.maximumf %18, %19 : vector<8x16xf32>
    %21 = arith.mulf %12, %15 : vector<8x16xf32>
    %cst_7 = arith.constant 1.000000e+00 : f32
    %22 = vector.broadcast %cst_7 : f32 to vector<8x16xf32>
    %23 = arith.subf %22, %12 : vector<8x16xf32>
    %24 = arith.mulf %23, %20 : vector<8x16xf32>
    %25 = arith.addf %21, %24 : vector<8x16xf32>
    %cst_8 = arith.constant 0.000000e+00 : f32
    %26 = vector.broadcast %cst_8 : f32 to vector<8x16xf32>
    %27 = arith.subf %26, %25 : vector<8x16xf32>
    %cst_9 = arith.constant 0.000000e+00 : f32
    %28 = vector.shape_cast %10 : vector<8x1xi1> to vector<8x1xi1>
    %29 = vector.broadcast %28 : vector<8x1xi1> to vector<8x16xi1>
    %30 = vector.broadcast %cst_9 : f32 to vector<8x16xf32>
    %31 = arith.select %29, %27, %30 : vector<8x16xi1>, vector<8x16xf32>
    %32 = vector.shape_cast %31 : vector<8x16xf32> to vector<1x8x16xf32>
    %cst_10 = arith.constant dense<0.000000e+00> : vector<1xf32>
    %33 = vector.multi_reduction <add>, %32, %cst_10 [1, 2] : vector<1x8x16xf32> to vector<1xf32>
    %34 = vector.shape_cast %33 : vector<1xf32> to vector<1x1x1xf32>
    %35 = vector.extract %34[0, 0, 0] : f32 from vector<1x1x1xf32>
    %c0_11 = arith.constant 0 : index
    %c0_12 = arith.constant 0 : index
    %36 = vector.load %arg4[%c0_11, %c0_12] : memref<8x8xf32, #tpu.memory_space<vmem>>, vector<8x8xf32>
    %c0_13 = arith.constant 0 : index
    %c0_14 = arith.constant 0 : index
    %37 = vector.load %arg5[%c0_13, %c0_14] : memref<8x1xi32, #tpu.memory_space<vmem>>, vector<8x1xi32>
    %cst_15 = arith.constant dense<0xFF800000> : vector<8xf32>
    %38 = vector.multi_reduction <maximumf>, %36, %cst_15 [1] : vector<8x8xf32> to vector<8xf32>
    %39 = vector.shape_cast %38 : vector<8xf32> to vector<8x1xf32>
    %40 = vector.broadcast %39 : vector<8x1xf32> to vector<8x8xf32>
    %41 = arith.subf %36, %40 : vector<8x8xf32>
    %42 = math.exp %41 : vector<8x8xf32>
    %cst_16 = arith.constant dense<0.000000e+00> : vector<8xf32>
    %43 = vector.multi_reduction <add>, %42, %cst_16 [1] : vector<8x8xf32> to vector<8xf32>
    %44 = vector.shape_cast %43 : vector<8xf32> to vector<8x1xf32>
    %45 = math.log %44 : vector<8x1xf32>
    %46 = arith.addf %39, %45 : vector<8x1xf32>
    %47 = tpu.iota {dimensions = array<i32: 1>} : vector<8x8xi32>
    %48 = vector.broadcast %37 : vector<8x1xi32> to vector<8x8xi32>
    %49 = arith.cmpi eq, %47, %48 : vector<8x8xi32>
    %50 = arith.extui %49 : vector<8x8xi1> to vector<8x8xi32>
    %51 = arith.sitofp %50 : vector<8x8xi32> to vector<8x8xf32>
    %52 = arith.mulf %36, %51 : vector<8x8xf32>
    %cst_17 = arith.constant dense<0.000000e+00> : vector<8xf32>
    %53 = vector.multi_reduction <add>, %52, %cst_17 [1] : vector<8x8xf32> to vector<8xf32>
    %54 = vector.shape_cast %53 : vector<8xf32> to vector<8x1xf32>
    %55 = arith.subf %46, %54 : vector<8x1xf32>
    %cst_18 = arith.constant 0.000000e+00 : f32
    %56 = vector.broadcast %cst_18 : f32 to vector<8x1xf32>
    %57 = arith.select %10, %55, %56 : vector<8x1xi1>, vector<8x1xf32>
    %58 = vector.shape_cast %57 : vector<8x1xf32> to vector<1x8x1xf32>
    %cst_19 = arith.constant dense<0.000000e+00> : vector<1xf32>
    %59 = vector.multi_reduction <add>, %58, %cst_19 [1, 2] : vector<1x8x1xf32> to vector<1xf32>
    %60 = vector.shape_cast %59 : vector<1xf32> to vector<1x1x1xf32>
    %61 = vector.extract %60[0, 0, 0] : f32 from vector<1x1x1xf32>
    %62 = tpu.iota {dimensions = array<i32: 0>} : vector<8x128xi32>
    %63 = tpu.iota {dimensions = array<i32: 1>} : vector<8x128xi32>
    %c0_i32_20 = arith.constant 0 : i32
    %64 = vector.broadcast %c0_i32_20 : i32 to vector<8x128xi32>
    %65 = arith.cmpi eq, %62, %64 : vector<8x128xi32>
    %c0_i32_21 = arith.constant 0 : i32
    %66 = vector.broadcast %c0_i32_21 : i32 to vector<8x128xi32>
    %67 = arith.cmpi eq, %63, %66 : vector<8x128xi32>
    %68 = arith.andi %65, %67 : vector<8x128xi1>
    %cst_22 = arith.constant 0.000000e+00 : f32
    %69 = vector.broadcast %35 : f32 to vector<8x128xf32>
    %70 = vector.broadcast %cst_22 : f32 to vector<8x128xf32>
    %71 = arith.select %68, %69, %70 : vector<8x128xi1>, vector<8x128xf32>
    %c0_i32_23 = arith.constant 0 : i32
    %72 = vector.broadcast %c0_i32_23 : i32 to vector<8x128xi32>
    %73 = arith.cmpi eq, %62, %72 : vector<8x128xi32>
    %c1_i32_24 = arith.constant 1 : i32
    %74 = vector.broadcast %c1_i32_24 : i32 to vector<8x128xi32>
    %75 = arith.cmpi eq, %63, %74 : vector<8x128xi32>
    %76 = arith.andi %73, %75 : vector<8x128xi1>
    %cst_25 = arith.constant 0.000000e+00 : f32
    %77 = vector.broadcast %61 : f32 to vector<8x128xf32>
    %78 = vector.broadcast %cst_25 : f32 to vector<8x128xf32>
    %79 = arith.select %76, %77, %78 : vector<8x128xi1>, vector<8x128xf32>
    %80 = arith.addf %71, %79 : vector<8x128xf32>
    %c0_26 = arith.constant 0 : index
    %c0_27 = arith.constant 0 : index
    %81 = vector.load %arg6[%c0_26, %c0_27] : memref<8x128xf32, #tpu.memory_space<vmem>>, vector<8x128xf32>
    %82 = arith.addf %81, %80 : vector<8x128xf32>
    %c0_28 = arith.constant 0 : index
    %c0_29 = arith.constant 0 : index
    %83 = vector.load %arg6[%c0_28, %c0_29] : memref<8x128xf32, #tpu.memory_space<vmem>>, vector<8x128xf32>
    tpu.vector_store %arg6[%c0_28, %c0_29], %82 {strides = array<i32>} : memref<8x128xf32, #tpu.memory_space<vmem>>, vector<8x128xf32>,
    return
  }
  func.func @transform_0(%arg0: i32, %arg1: i32) -> (i32, i32) {
    %c1_i32 = arith.constant 1 : i32
    %0 = arith.muli %arg0, %c1_i32 : i32
    %1 = arith.addi %0, %arg1 : i32
    %c0_i32 = arith.constant 0 : i32
    %2 = arith.minsi %1, %c0_i32 : i32
    %c0_i32_0 = arith.constant 0 : i32
    %c0_i32_1 = arith.constant 0 : i32
    return %2, %c0_i32_0 : i32, i32
  }
  func.func @transform_1(%arg0: i32, %arg1: i32) -> (i32, i32) {
    %c1_i32 = arith.constant 1 : i32
    %0 = arith.muli %arg0, %c1_i32 : i32
    %1 = arith.addi %0, %arg1 : i32
    %c0_i32 = arith.constant 0 : i32
    %2 = arith.minsi %1, %c0_i32 : i32
    %c0_i32_0 = arith.constant 0 : i32
    %c0_i32_1 = arith.constant 0 : i32
    return %2, %c0_i32_0 : i32, i32
  }
  func.func @transform_2(%arg0: i32, %arg1: i32) -> (i32, i32) {
    %c1_i32 = arith.constant 1 : i32
    %0 = arith.muli %arg0, %c1_i32 : i32
    %1 = arith.addi %0, %arg1 : i32
    %c0_i32 = arith.constant 0 : i32
    %2 = arith.minsi %1, %c0_i32 : i32
    %c0_i32_0 = arith.constant 0 : i32
    %c0_i32_1 = arith.constant 0 : i32
    return %2, %c0_i32_0 : i32, i32
  }
  func.func @transform_3(%arg0: i32, %arg1: i32) -> (i32, i32) {
    %c1_i32 = arith.constant 1 : i32
    %0 = arith.muli %arg0, %c1_i32 : i32
    %1 = arith.addi %0, %arg1 : i32
    %c0_i32 = arith.constant 0 : i32
    %2 = arith.minsi %1, %c0_i32 : i32
    %c0_i32_0 = arith.constant 0 : i32
    %c0_i32_1 = arith.constant 0 : i32
    return %2, %c0_i32_0 : i32, i32
  }
  func.func @transform_4(%arg0: i32, %arg1: i32) -> (i32, i32) {
    %c0_i32 = arith.constant 0 : i32
    %c0_i32_0 = arith.constant 0 : i32
    return %arg0, %c0_i32 : i32, i32
  }
}

</mosaic_0001>

<llo_original>
// kernel: tpu_custom_call.1
$region0: #{tpu_custom_call.1}
  #allocation0 [shape = 'u32[]', space=smem, size = 0x4, offset = 0x4, fixed_abs, tag = 'smem constant byte address 0x4 - core index']
  #allocation1 [shape = 'u32[144,128]{1,0:T(1,128)}', space=vmem, size = 0x12000, scoped, tag = 'internal scratch']
  %s0 = inlined_call_operand.vmem [shape: f32[8,16], index: 0, kind: input, shape index: {}]
  %s1 = inlined_call_operand.hbm [shape: f32[8,16], index: 1, kind: input, shape index: {}]
  %s2 = inlined_call_operand.hbm [shape: f32[8,8], index: 2, kind: input, shape index: {}]
  %s3 = inlined_call_operand.vmem [shape: s32[8,1], index: 3, kind: input, shape index: {}]
  %s4 = inlined_call_operand.hbm [shape: f32[16,128], index: 4, kind: output, shape index: {}]
  %s5 = sld [smem:[#allocation0]]
  $region61: #{tpu_custom_call.1} parent=0
    _
  %s7 = ssub.s32 1, %s5
  %s8 = scalar_select 0, %s7, %s5
  $region1: #{tpu_custom_call.1} parent=0
    #allocation2 [shape = 'u8[8192]{0}', space=vmem, size = 0x2000, scoped, tag = 'input window, operand 1']
    #allocation3 [shape = 's32[2]{0}', space=sflag, size = 0x8, scoped, tag = 'scoped memory for tpu_custom_call.1']
    #allocation4 [shape = 's32[2]{0}', space=sflag, size = 0x8, scoped, tag = 'scoped memory for tpu_custom_call.1']
    #allocation5 [shape = 'u8[8192]{0}', space=vmem, size = 0x2000, scoped, tag = 'input window, operand 2']
    #allocation6 [shape = 's32[2]{0}', space=sflag, size = 0x8, scoped, tag = 'scoped memory for tpu_custom_call.1']
    #allocation7 [shape = 'u8[8192]{0}', space=vmem, size = 0x2000, scoped, tag = 'output window, operand 0']
    %9 = vsyncpa [#allocation3], 0
    %s10 = scalar_lea.sflag [#allocation3], 1
    %11 = vsyncpa %s10, 0
    %12 = vsyncpa [#allocation6], 0
    %s13 = scalar_lea.sflag [#allocation6], 1
    %14 = vsyncpa %s13, 0
    %15 = vsyncpa [#allocation4], 0
    %s16 = scalar_lea.sflag [#allocation4], 1
    %17 = vsyncpa %s16, 0
    loop: start=0, step=1, limit=4
    $region2: #{tpu_custom_call.1} parent=1 // loop_pre_header
      _
    $region3: #{tpu_custom_call.1} parent=1 // loop_header
      %s19 = sphi 0, %s23
      %p20 = scmp.ge.s32.totalorder %s19, 4
      %s26 = sphi 0, %s38
      %s27 = sphi 0, %s34
      %s28 = sphi 0, %s26
      %s29 = sphi 0, %s27
      %s30 = sphi 0, %s28
      %s31 = sphi 0, %s29
      %s47 = sphi 0, %s49
      %s50 = sphi 0, %s47
      %s51 = sphi 0, %s50
      %s67 = sphi 0, %s51
      %s79 = sphi 0, %s81
      %s82 = sphi 0, %s79
      %s83 = sphi 0, %s82
      %s99 = sphi 0, %s83
      %s111 = sphi 0, %s113
      %s114 = sphi 0, %s111
      %s115 = sphi 0, %s114
      %s131 = sphi 0, %s115
      %s143 = sphi 0, %s145
      %s146 = sphi 0, %s143
      %s147 = sphi 0, %s146
      %s163 = sphi 0, %s147
      %s169 = sphi 0, %s171
      %s172 = sphi 0, %s169
      %s173 = sphi 0, %s172
      %s189 = sphi 0, %s173
    $region4: #{tpu_custom_call.1} parent=1 // loop_header_branch
      %22 = sbr.rel (%p20) target = $region8
    $region5: #{tpu_custom_call.1} parent=1 // loop_body
      %s24 = ssub.s32 %s19, 1
      %s25 = ssub.s32 %s19, 2
      %s32 = sadd.s32 1, %s27
      %p33 = scmp.ge.s32.totalorder %s32, 1
      %s34 = scalar_select %p33, 0, %s32
      %s35 = sadd.s32 1, %s26
      %s36 = scalar_select %p33, %s35, %s26
      %p37 = scmp.ge.s32.totalorder %s36, 2
      %s38 = scalar_select %p37, 0, %s36
      %s39 = sadd.s32 %s26, %s27
      %p40 = scmp.lt.s32.totalorder %s39, 0
      %s41 = scalar_select %p40, %s39, 0
      %s42 = sadd.s32 %s38, %s34
      %p43 = scmp.lt.s32.totalorder %s42, 0
      %s44 = scalar_select %p43, %s42, 0
      %s45 = ssub.s32 %s41, %s44
      %p46 = scmp.eq.s32.totalorder %s45, 0
      %s48 = sadd.s32 %s47, 1
      %s49 = scalar_select %p46, %s47, %s48
      %p52 = pneg %p46
      %p53 = scmp.eq.s32.totalorder %s19, 1
      %p54 = por %p52, %p53
      %p55 = scmp.ne.s32.totalorder %s47, %s50
      %p56 = scmp.eq.s32.totalorder %s19, 0
      %p57 = por %p55, %p56
      %p58 = scmp.ne.s32.totalorder %s47, %s50
      %p59 = scmp.eq.s32.totalorder %s24, 1
      %p60 = por %p58, %p59
      %p61 = scmp.ne.s32.totalorder %s50, %s51
      %p62 = scmp.eq.s32.totalorder %s24, 0
      %p63 = por %p61, %p62
      %p64 = scmp.ne.s32.totalorder %s50, %s51
      %p65 = scmp.eq.s32.totalorder %s25, 1
      %p66 = por %p64, %p65
      %p68 = scmp.ne.s32.totalorder %s51, %s67
      %p69 = scmp.eq.s32.totalorder %s25, 0
      %p70 = por %p68, %p69
      %s71 = sadd.s32 %s26, %s27
      %p72 = scmp.lt.s32.totalorder %s71, 0
      %s73 = scalar_select %p72, %s71, 0
      %s74 = sadd.s32 %s38, %s34
      %p75 = scmp.lt.s32.totalorder %s74, 0
      %s76 = scalar_select %p75, %s74, 0
      %s77 = ssub.s32 %s73, %s76
      %p78 = scmp.eq.s32.totalorder %s77, 0
      %s80 = sadd.s32 %s79, 1
      %s81 = scalar_select %p78, %s79, %s80
      %p84 = pneg %p78
      %p85 = scmp.eq.s32.totalorder %s19, 1
      %p86 = por %p84, %p85
      %p87 = scmp.ne.s32.totalorder %s79, %s82
      %p88 = scmp.eq.s32.totalorder %s19, 0
      %p89 = por %p87, %p88
      %p90 = scmp.ne.s32.totalorder %s79, %s82
      %p91 = scmp.eq.s32.totalorder %s24, 1
      %p92 = por %p90, %p91
      %p93 = scmp.ne.s32.totalorder %s82, %s83
      %p94 = scmp.eq.s32.totalorder %s24, 0
      %p95 = por %p93, %p94
      %p96 = scmp.ne.s32.totalorder %s82, %s83
      %p97 = scmp.eq.s32.totalorder %s25, 1
      %p98 = por %p96, %p97
      %p100 = scmp.ne.s32.totalorder %s83, %s99
      %p101 = scmp.eq.s32.totalorder %s25, 0
      %p102 = por %p100, %p101
      %s103 = sadd.s32 %s26, %s27
      %p104 = scmp.lt.s32.totalorder %s103, 0
      %s105 = scalar_select %p104, %s103, 0
      %s106 = sadd.s32 %s38, %s34
      %p107 = scmp.lt.s32.totalorder %s106, 0
      %s108 = scalar_select %p107, %s106, 0
      %s109 = ssub.s32 %s105, %s108
      %p110 = scmp.eq.s32.totalorder %s109, 0
      %s112 = sadd.s32 %s111, 1
      %s113 = scalar_select %p110, %s111, %s112
      %p116 = pneg %p110
      %p117 = scmp.eq.s32.totalorder %s19, 1
      %p118 = por %p116, %p117
      %p119 = scmp.ne.s32.totalorder %s111, %s114
      %p120 = scmp.eq.s32.totalorder %s19, 0
      %p121 = por %p119, %p120
      %p122 = scmp.ne.s32.totalorder %s111, %s114
      %p123 = scmp.eq.s32.totalorder %s24, 1
      %p124 = por %p122, %p123
      %p125 = scmp.ne.s32.totalorder %s114, %s115
      %p126 = scmp.eq.s32.totalorder %s24, 0
      %p127 = por %p125, %p126
      %p128 = scmp.ne.s32.totalorder %s114, %s115
      %p129 = scmp.eq.s32.totalorder %s25, 1
      %p130 = por %p128, %p129
      %p132 = scmp.ne.s32.totalorder %s115, %s131
      %p133 = scmp.eq.s32.totalorder %s25, 0
      %p134 = por %p132, %p133
      %s135 = sadd.s32 %s26, %s27
      %p136 = scmp.lt.s32.totalorder %s135, 0
      %s137 = scalar_select %p136, %s135, 0
      %s138 = sadd.s32 %s38, %s34
      %p139 = scmp.lt.s32.totalorder %s138, 0
      %s140 = scalar_select %p139, %s138, 0
      %s141 = ssub.s32 %s137, %s140
      %p142 = scmp.eq.s32.totalorder %s141, 0
      %s144 = sadd.s32 %s143, 1
      %s145 = scalar_select %p142, %s143, %s144
      %p148 = pneg %p142
      %p149 = scmp.eq.s32.totalorder %s19, 1
      %p150 = por %p148, %p149
      %p151 = scmp.ne.s32.totalorder %s143, %s146
      %p152 = scmp.eq.s32.totalorder %s19, 0
      %p153 = por %p151, %p152
      %p154 = scmp.ne.s32.totalorder %s143, %s146
      %p155 = scmp.eq.s32.totalorder %s24, 1
      %p156 = por %p154, %p155
      %p157 = scmp.ne.s32.totalorder %s146, %s147
      %p158 = scmp.eq.s32.totalorder %s24, 0
      %p159 = por %p157, %p158
      %p160 = scmp.ne.s32.totalorder %s146, %s147
      %p161 = scmp.eq.s32.totalorder %s25, 1
      %p162 = por %p160, %p161
      %p164 = scmp.ne.s32.totalorder %s147, %s163
      %p165 = scmp.eq.s32.totalorder %s25, 0
      %p166 = por %p164, %p165
      %s167 = ssub.s32 %s26, %s38
      %p168 = scmp.eq.s32.totalorder %s167, 0
      %s170 = sadd.s32 %s169, 1
      %s171 = scalar_select %p168, %s169, %s170
      %p174 = pneg %p168
      %p175 = scmp.eq.s32.totalorder %s19, 1
      %p176 = por %p174, %p175
      %p177 = scmp.ne.s32.totalorder %s169, %s172
      %p178 = scmp.eq.s32.totalorder %s19, 0
      %p179 = por %p177, %p178
      %p180 = scmp.ne.s32.totalorder %s169, %s172
      %p181 = scmp.eq.s32.totalorder %s24, 1
      %p182 = por %p180, %p181
      %p183 = scmp.ne.s32.totalorder %s172, %s173
      %p184 = scmp.eq.s32.totalorder %s24, 0
      %p185 = por %p183, %p184
      %p186 = scmp.ne.s32.totalorder %s172, %s173
      %p187 = scmp.eq.s32.totalorder %s25, 1
      %p188 = por %p186, %p187
      %p190 = scmp.ne.s32.totalorder %s173, %s189
      %p191 = scmp.eq.s32.totalorder %s25, 0
      %p192 = por %p190, %p191
      %p193 = scmp.le.s32.totalorder 1, %s19
      %p194 = scmp.lt.s32.totalorder %s19, 3
      %p195 = pnand %p193, %p194
      %p196 = pneg %p195
      // Predicated region
      $region9: #{tpu_custom_call.1} parent=5 // pred_check
        _
      $region10: #{tpu_custom_call.1} parent=5 // pred_check_branch
        %198 = sbr.rel (%p195) target = $region12
      $region11: #{tpu_custom_call.1} parent=5 // pred_region
        %s199 = ssub.s32 %s19, 1
      $region12: #{tpu_custom_call.1} parent=5 // pred_fallthru
        _
      %p200 = scmp.lt.s32.totalorder %s19, 2
      // Predicated region
      $region13: #{tpu_custom_call.1} parent=5 // pred_check
        %p201 = pneg %p200
      $region14: #{tpu_custom_call.1} parent=5 // pred_check_branch
        %203 = sbr.rel (%p201) target = $region16
      $region15: #{tpu_custom_call.1} parent=5 // pred_region
        // Predicated region
        $region17: #{tpu_custom_call.1} parent=15 // pred_check
          %p204 = pneg %p57
        $region18: #{tpu_custom_call.1} parent=15 // pred_check_branch
          %206 = sbr.rel (%p204) target = $region20
        $region19: #{tpu_custom_call.1} parent=15 // pred_region
          %s207 = sadd.s32 %s26, %s27
          %p208 = scmp.lt.s32.totalorder %s207, 0
          %s209 = scalar_select %p208, %s207, 0
          %p210 = scmp.lt.s32.totalorder %s209, 0
          %s211 = scalar_select %p210, %s209, 0
          %s212 = smul.addr %s211, 8
          %s213 = scalar_lea.vmem %s0, %s212
          %s214 = sadd.s32 %s26, %s27
          %p215 = scmp.lt.s32.totalorder %s214, 0
          %s216 = scalar_select %p215, %s214, 0
        $region20: #{tpu_custom_call.1} parent=15 // pred_fallthru
          _
        // Predicated region
        $region21: #{tpu_custom_call.1} parent=15 // pred_check
          %p217 = pneg %p89
        $region22: #{tpu_custom_call.1} parent=15 // pred_check_branch
          %219 = sbr.rel (%p217) target = $region24
        $region23: #{tpu_custom_call.1} parent=15 // pred_region
          %s220 = sand.u32 %s79, 1
          %s221 = scalar_lea.sflag [#allocation3], %s220
          %s222 = sand.u32 %s79, 1
          %s223 = smul.addr %s222, 8
          %s224 = scalar_lea.vmem [#allocation2], %s223
          %s225 = sadd.s32 %s26, %s27
          %p226 = scmp.lt.s32.totalorder %s225, 0
          %s227 = scalar_select %p226, %s225, 0
          %s229 = ssub.s32 128, 128
          %230 = vsyncadd %s221, %s229
          %s231 = smul.addr %s227, 128
          %s232 = scalar_lea.hbm %s1, %s231
          %s234 = sshll.u32 %s224, 4
          %s235 = int_to_ptr.vmem [resolvable:$true] %s234
          %237 = dma.hbm_to_vmem [thread:$0]  %s232, 128, %s235, %s221
        $region24: #{tpu_custom_call.1} parent=15 // pred_fallthru
          _
        // Predicated region
        $region25: #{tpu_custom_call.1} parent=15 // pred_check
          %p238 = pneg %p121
        $region26: #{tpu_custom_call.1} parent=15 // pred_check_branch
          %240 = sbr.rel (%p238) target = $region28
        $region27: #{tpu_custom_call.1} parent=15 // pred_region
          %s241 = sand.u32 %s111, 1
          %s242 = scalar_lea.sflag [#allocation6], %s241
          %s243 = sand.u32 %s111, 1
          %s244 = smul.addr %s243, 8
          %s245 = scalar_lea.vmem [#allocation5], %s244
          %s246 = sadd.s32 %s26, %s27
          %p247 = scmp.lt.s32.totalorder %s246, 0
          %s248 = scalar_select %p247, %s246, 0
          %s250 = ssub.s32 128, 128
          %251 = vsyncadd %s242, %s250
          %s252 = smul.addr %s248, 128
          %s253 = scalar_lea.hbm %s2, %s252
          %s255 = sshll.u32 %s245, 4
          %s256 = int_to_ptr.vmem [resolvable:$true] %s255
          %258 = dma.hbm_to_vmem [thread:$0]  %s253, 128, %s256, %s242
        $region28: #{tpu_custom_call.1} parent=15 // pred_fallthru
          _
        // Predicated region
        $region29: #{tpu_custom_call.1} parent=15 // pred_check
          %p259 = pneg %p153
        $region30: #{tpu_custom_call.1} parent=15 // pred_check_branch
          %261 = sbr.rel (%p259) target = $region32
        $region31: #{tpu_custom_call.1} parent=15 // pred_region
          %s262 = sadd.s32 %s26, %s27
          %p263 = scmp.lt.s32.totalorder %s262, 0
          %s264 = scalar_select %p263, %s262, 0
          %p265 = scmp.lt.s32.totalorder %s264, 0
          %s266 = scalar_select %p265, %s264, 0
          %s267 = smul.addr %s266, 8
          %s268 = scalar_lea.vmem %s3, %s267
          %s269 = sadd.s32 %s26, %s27
          %p270 = scmp.lt.s32.totalorder %s269, 0
          %s271 = scalar_select %p270, %s269, 0
        $region32: #{tpu_custom_call.1} parent=15 // pred_fallthru
          _
      $region16: #{tpu_custom_call.1} parent=5 // pred_fallthru
        _
      %p272 = scmp.le.s32.totalorder 1, %s19
      %p273 = scmp.lt.s32.totalorder %s19, 3
      %p274 = pnand %p272, %p273
      %p275 = pneg %p274
      // Predicated region
      $region33: #{tpu_custom_call.1} parent=5 // pred_check
        _
      $region34: #{tpu_custom_call.1} parent=5 // pred_check_branch
        %277 = sbr.rel (%p274) target = $region36
      $region35: #{tpu_custom_call.1} parent=5 // pred_region
        %s278 = ssub.s32 %s19, 1
        %s279 = sand.u32 %s82, 1
        %s280 = scalar_lea.sflag [#allocation3], %s279
        %s281 = sand.u32 %s82, 1
        %s282 = smul.addr %s281, 8
        %s283 = scalar_lea.vmem [#allocation2], %s282
        // Predicated region
        $region37: #{tpu_custom_call.1} parent=35 // pred_check
          %p284 = pneg %p95
        $region38: #{tpu_custom_call.1} parent=35 // pred_check_branch
          %286 = sbr.rel (%p284) target = $region40
        $region39: #{tpu_custom_call.1} parent=35 // pred_region
          %287 = dma.done %s280, 128
        $region40: #{tpu_custom_call.1} parent=35 // pred_fallthru
          _
        %s288 = sand.u32 %s114, 1
        %s289 = scalar_lea.sflag [#allocation6], %s288
        %s290 = sand.u32 %s114, 1
        %s291 = smul.addr %s290, 8
        %s292 = scalar_lea.vmem [#allocation5], %s291
        // Predicated region
        $region41: #{tpu_custom_call.1} parent=35 // pred_check
          %p293 = pneg %p127
        $region42: #{tpu_custom_call.1} parent=35 // pred_check_branch
          %295 = sbr.rel (%p293) target = $region44
        $region43: #{tpu_custom_call.1} parent=35 // pred_region
          %296 = dma.done %s289, 128
        $region44: #{tpu_custom_call.1} parent=35 // pred_fallthru
          _
        %s297 = sadd.s32 %s28, %s29
        %p298 = scmp.lt.s32.totalorder %s297, 0
        %s299 = scalar_select %p298, %s297, 0
        %p300 = scmp.lt.s32.totalorder %s299, 0
        %s301 = scalar_select %p300, %s299, 0
        %s302 = smul.addr %s301, 8
        %s303 = scalar_lea.vmem %s0, %s302
        %p304 = pneg %p63
        %p305 = pneg %p60
        %s306 = sand.u32 %s82, 1
        %s307 = scalar_lea.sflag [#allocation3], %s306
        %s308 = sand.u32 %s82, 1
        %s309 = smul.addr %s308, 8
        %s310 = scalar_lea.vmem [#allocation2], %s309
        %p311 = pneg %p95
        %p312 = pneg %p92
        %s313 = sand.u32 %s114, 1
        %s314 = scalar_lea.sflag [#allocation6], %s313
        %s315 = sand.u32 %s114, 1
        %s316 = smul.addr %s315, 8
        %s317 = scalar_lea.vmem [#allocation5], %s316
        %p318 = pneg %p127
        %p319 = pneg %p124
        %s320 = sadd.s32 %s28, %s29
        %p321 = scmp.lt.s32.totalorder %s320, 0
        %s322 = scalar_select %p321, %s320, 0
        %p323 = scmp.lt.s32.totalorder %s322, 0
        %s324 = scalar_select %p323, %s322, 0
        %s325 = smul.addr %s324, 8
        %s326 = scalar_lea.vmem %s3, %s325
        %p327 = pneg %p159
        %p328 = pneg %p156
        %p329 = pneg %p185
        %p330 = pneg %p182
        %s331 = sand.u32 %s172, 1
        %s332 = scalar_lea.sflag [#allocation4], %s331
        %s333 = sand.u32 %s172, 1
        %s334 = smul.addr %s333, 8
        %s335 = scalar_lea.vmem [#allocation7], %s334
        %s336 = sadd.s32 %s28, %s29
        %p337 = scmp.lt.s32.totalorder %s336, 0
        %s338 = scalar_select %p337, %s336, 0
        %p339 = scmp.lt.s32.totalorder %s338, 0
        %s340 = scalar_select %p339, %s338, 0
        %s341 = smul.addr %s340, 8
        %s342 = scalar_lea.vmem %s0, %s341
        %s343 = sadd.s32 %s28, %s29
        %p344 = scmp.lt.s32.totalorder %s343, 0
        %s345 = scalar_select %p344, %s343, 0
        %s346 = sadd.s32 %s28, %s29
        %p347 = scmp.lt.s32.totalorder %s346, 0
        %s348 = scalar_select %p347, %s346, 0
        %s349 = sadd.s32 %s28, %s29
        %p350 = scmp.lt.s32.totalorder %s349, 0
        %s351 = scalar_select %p350, %s349, 0
        %s352 = sadd.s32 %s28, %s29
        %p353 = scmp.lt.s32.totalorder %s352, 0
        %s354 = scalar_select %p353, %s352, 0
        %p355 = scmp.lt.s32.totalorder %s354, 0
        %s356 = scalar_select %p355, %s354, 0
        %s357 = smul.addr %s356, 8
        %s358 = scalar_lea.vmem %s3, %s357
        %s359 = sadd.s32 %s28, %s29
        %p360 = scmp.lt.s32.totalorder %s359, 0
        %s361 = scalar_select %p360, %s359, 0
        %p362 = scmp.eq.s32.totalorder %s29, 0
        // Predicated region
        $region45: #{tpu_custom_call.1} parent=35 // pred_check
          %p363 = pneg %p362
        $region46: #{tpu_custom_call.1} parent=35 // pred_check_branch
          %365 = sbr.rel (%p363) target = $region48
        $region47: #{tpu_custom_call.1} parent=35 // pred_region
          %366 = vst [vmem:[%s335] sm:$0xff] 0.0
        $region48: #{tpu_custom_call.1} parent=35 // pred_fallthru
          _
        %s367 = sadd.s32 %s28, %s29
        %s368 = smul.u32 %s367, 8
        %v369 = vlaneseq
        %v370 = vshrl.u32 %v369, 7
        %v371 = vstv %s368
        %v372 = vadd.s32 %v371, %v370
        %vm373 = vcmp.lt.s32.totalorder %v372, 8
        %v374 = vld [vmem:[%s342] sm:$0xff]
        %v375 = vld [vmem:[%s283] sm:$0xff]
        %v376 = vlog2.pop %v374
        %v377 = vmul.f32 %v376, 0.6931472
        %v378 = vmax.f32 %v377, -100.0
        %v379 = vsub.f32 1.0, %v374
        %v380 = vlog2.pop %v379
        %v381 = vmul.f32 %v380, 0.6931472
        %v382 = vmax.f32 %v381, -100.0
        %v383 = vmul.f32 %v375, %v378
        %v384 = vsub.f32 1.0, %v375
        %v385 = vmul.f32 %v384, %v382
        %v386 = vadd.f32 %v383, %v385
        %v387 = vsub.f32 0.0, %v386
        %v388 = vsel %vm373, 1, 0
        %vm389 = vcmp.eq.s32.totalorder %v388, 1
        %v390 = vsel %vm389, %v387, 0.0
        %vm391 = vcmask 130048
        %v392 = vsel %vm391, %v390, 0.0
        %393 = vadd.xlane.f32.xlu0 %v392
        %v394 = vpop.xlane.xlu0 %393
        %v395 = vrot.slane %v394, 4
        %v396 = vadd.f32 %v394, %v395
        %v397 = vrot.slane %v396, 2
        %v398 = vadd.f32 %v396, %v397
        %v399 = vrot.slane %v398, 1
        %v400 = vadd.f32 %v398, %v399
        %s401 = vtos %v400
        %v402 = vld [vmem:[%s292] sm:$0xff]
        %v403 = vld [vmem:[%s358] sm:$0xff]
        %vm404 = vcmask 64512
        %v405 = vsel %vm404, %v402, -inf
        %406 = vmax.xlane.f32.xlu0 %v405
        %v407 = vpop.xlane.xlu0 %406
        %v408 = vsub.f32 %v402, %v407
        %v409 = vmul.f32 %v408, 1.442695
        %v410 = vpow.pop %v409
        %v411 = vsel %vm404, %v410, 0.0
        %412 = vadd.xlane.f32.xlu0 %v411
        %v413 = vpop.xlane.xlu0 %412
        %v414 = vlog2.pop %v413
        %v415 = vmul.f32 %v414, 0.6931472
        %v416 = vadd.f32 %v407, %v415
        %v417 = vlaneseq
        %v418 = vand.u32 %v417, 127
        %419 = vset.pattern.permute.xlu0 0
        %420 = vperm.xlu0 %419, %v403
        %v421 = vpop.permute.xlu0 %420
        %vm422 = vcmp.eq.s32.totalorder %v418, %v421
        %v423 = vsel %vm422, 1, 0
        %v424 = vcvt.s32.f32 %v423
        %v425 = vmul.f32 %v402, %v424
        %v426 = vsel %vm404, %v425, 0.0
        %427 = vadd.xlane.f32.xlu0 %v426
        %v428 = vpop.xlane.xlu0 %427
        %v429 = vsub.f32 %v416, %v428
        %v430 = vsel %vm373, %v429, 0.0
        %vm431 = vcmask 7168
        %v432 = vsel %vm431, %v430, 0.0
        %433 = vadd.xlane.f32.xlu0 %v432
        %v434 = vpop.xlane.xlu0 %433
        %v435 = vrot.slane %v434, 4
        %v436 = vadd.f32 %v434, %v435
        %v437 = vrot.slane %v436, 2
        %v438 = vadd.f32 %v436, %v437
        %v439 = vrot.slane %v438, 1
        %v440 = vadd.f32 %v438, %v439
        %s441 = vtos %v440
        %vm442 = vcmp.eq.s32.totalorder %v370, 0
        %vm443 = vcmp.eq.s32.totalorder %v418, 0
        %vm444 = vmand %vm442, %vm443
        %v445 = vstv %s401
        %v446 = vsel %vm444, %v445, 0.0
        %vm447 = vcmp.eq.s32.totalorder %v418, 1
        %vm448 = vmand %vm442, %vm447
        %v449 = vstv %s441
        %v450 = vsel %vm448, %v449, 0.0
        %v451 = vadd.f32 %v446, %v450
        %v452 = vld [vmem:[%s335] sm:$0xff]
        %v453 = vadd.f32 %v452, %v451
        %454 = vst [vmem:[%s335] sm:$0xff] %v453
        %s455 = sand.u32 %s172, 1
        %s456 = scalar_lea.sflag [#allocation4], %s455
        %s457 = sand.u32 %s172, 1
        %s458 = smul.addr %s457, 8
        %s459 = scalar_lea.vmem [#allocation7], %s458
        // Predicated region
        $region49: #{tpu_custom_call.1} parent=35 // pred_check
          %p460 = pneg %p182
        $region50: #{tpu_custom_call.1} parent=35 // pred_check_branch
          %462 = sbr.rel (%p460) target = $region52
        $region51: #{tpu_custom_call.1} parent=35 // pred_region
          %s464 = ssub.s32 128, 128
          %465 = vsyncadd %s456, %s464
          %s466 = smul.addr %s28, 128
          %s467 = scalar_lea.hbm %s4, %s466
          %s469 = sshll.u32 %s459, 4
          %s470 = int_to_ptr.vmem [resolvable:$true] %s469
          %472 = dma.vmem_to_hbm [thread:$0]  %s470, 128, %s467, %s456
        $region52: #{tpu_custom_call.1} parent=35 // pred_fallthru
          _
      $region36: #{tpu_custom_call.1} parent=5 // pred_fallthru
        _
      %p473 = scmp.le.s32.totalorder 2, %s19
      // Predicated region
      $region53: #{tpu_custom_call.1} parent=5 // pred_check
        %p474 = pneg %p473
      $region54: #{tpu_custom_call.1} parent=5 // pred_check_branch
        %476 = sbr.rel (%p474) target = $region56
      $region55: #{tpu_custom_call.1} parent=5 // pred_region
        %s477 = ssub.s32 %s19, 2
        // Predicated region
        $region57: #{tpu_custom_call.1} parent=55 // pred_check
          %p478 = pneg %p188
        $region58: #{tpu_custom_call.1} parent=55 // pred_check_branch
          %480 = sbr.rel (%p478) target = $region60
        $region59: #{tpu_custom_call.1} parent=55 // pred_region
          %s481 = sand.u32 %s173, 1
          %s482 = scalar_lea.sflag [#allocation4], %s481
          %s483 = sand.u32 %s173, 1
          %s484 = smul.addr %s483, 8
          %s485 = scalar_lea.vmem [#allocation7], %s484
          %486 = dma.done %s482, 128
        $region60: #{tpu_custom_call.1} parent=55 // pred_fallthru
          _
      $region56: #{tpu_custom_call.1} parent=5 // pred_fallthru
        _
    $region6: #{tpu_custom_call.1} parent=1 // loop_footer
      %s23 = sadd.s32 1, %s19
    $region7: #{tpu_custom_call.1} parent=1 // loop_footer_branch
      %18 = sbr.rel target = $region3
    $region8: #{tpu_custom_call.1} parent=1 // loop_exit
      _
    %487 = vsyncpa [#allocation3], 1
    %s488 = scalar_lea.sflag [#allocation3], 1
    %489 = vsyncpa %s488, 1
    %490 = vsyncpa [#allocation6], 1
    %s491 = scalar_lea.sflag [#allocation6], 1
    %492 = vsyncpa %s491, 1
    %493 = vsyncpa [#allocation4], 1
    %s494 = scalar_lea.sflag [#allocation4], 1
    %495 = vsyncpa %s494, 1

</llo_original>
